<compile_context>
chip_gen: v7x
topology: tpu7x:2x2x1
jax: 0.10.0
libtpu: 0.0.40
codegen_flags: <defaults>
</compile_context>

<pallas_src>
import jax
import jax.numpy as jnp
from jax.experimental import pallas as pl
from jax.experimental.pallas import tpu as pltpu


def _round_up(v, m):
    return ((v + m - 1) // m) * m


def encoder_kernel(x_ref,
                   w1_ref, b1_ref,
                   w2_ref, b2_ref,
                   w3_ref, b3_ref,
                   wh_ref, bh_ref,
                   heads_ref):
    """One batch tile of the encoder.

    All matmul operands are bf16 (MXU-native on v6e/v7x); accumulation,
    bias-add and ReLU are f32.  heads_ref holds [mu | logvar] padded to a
    multiple of 128 lanes, so the final store is a single lane-dense slab.
    """
    x = x_ref[...]                                            # bf16 (tile_b, in)

    # Hidden layer 1: Linear + ReLU (f32 accumulate / elementwise)
    h1 = jnp.dot(x, w1_ref[...], preferred_element_type=jnp.float32) + b1_ref[...]
    h1 = jnp.maximum(h1, 0.0).astype(jnp.bfloat16)

    # Hidden layer 2: Linear + ReLU
    h2 = jnp.dot(h1, w2_ref[...], preferred_element_type=jnp.float32) + b2_ref[...]
    h2 = jnp.maximum(h2, 0.0).astype(jnp.bfloat16)

    # Layer 3 (no activation) kept separate from the heads: avoids the +FLOPs
    # of folding when hidden2 > 2*latent and keeps summation order sane.
    z = jnp.dot(h2, w3_ref[...], preferred_element_type=jnp.float32) + b3_ref[...]
    z = z.astype(jnp.bfloat16)

    # Fused [mu | logvar] heads: one wide matmul, one lane-dense store.
    heads = jnp.dot(z, wh_ref[...], preferred_element_type=jnp.float32) + bh_ref[...]
    heads_ref[...] = heads.astype(heads_ref.dtype)


def encoder_forward(x, params, *, tile_b=512):
    """x: (B, input_dim) float32. params: dict of f32 weights/biases.

    Returns (mu, logvar), each (B, latent_dim) float32.
    """
    B, in_dim = x.shape
    hidden1 = params["w1"].shape[1]
    hidden2 = params["w2"].shape[1]
    latent = params["wmu"].shape[1]
    out_dim = 2 * latent
    out_dim_pad = _round_up(out_dim, 128)       # lane-dense output slab width

    # ---- host-side packing (cheap, off the kernel critical path) ----
    bf16 = jnp.bfloat16
    w1 = params["w1"].astype(bf16)
    w2 = params["w2"].astype(bf16)
    w3 = params["w3"].astype(bf16)
    wh = jnp.concatenate([params["wmu"], params["wlv"]], axis=1)    # (L, 2L)
    bh = jnp.concatenate([params["bmu"], params["blv"]], axis=1)    # (1, 2L)
    if out_dim_pad != out_dim:
        wh = jnp.pad(wh, ((0, 0), (0, out_dim_pad - out_dim)))
        bh = jnp.pad(bh, ((0, 0), (0, out_dim_pad - out_dim)))
    wh = wh.astype(bf16)
    b1 = params["b1"].astype(jnp.float32)
    b2 = params["b2"].astype(jnp.float32)
    b3 = params["b3"].astype(jnp.float32)
    bh = bh.astype(jnp.float32)

    xb = x.astype(bf16)

    # ---- batch tiling ----
    b8 = _round_up(B, 8)
    if b8 <= tile_b:
        # Small batch: single tile, grid=(1,).  Pad is < 8 rows.
        tile_eff = b8
    else:
        # Large batch: big 128-multiple tiles (v5e MXU rows, amortizes the
        # ~0.35us per-step overhead).  Since b8 > tile_eff this guarantees
        # >= 2 grid steps, so v7x can shard batch tiles across both cores.
        tile_eff = max(128, (min(tile_b, 1024) // 128) * 128)
    b_pad = _round_up(b8, tile_eff)             # pad is at most one tile
    if b_pad != B:
        xb = jnp.pad(xb, ((0, b_pad - B), (0, 0)))
    grid = (b_pad // tile_eff,)

    # ---- VMEM budget (Pallas double-buffers every spec by default) ----
    weight_bytes = 2 * (in_dim * hidden1 + hidden1 * hidden2
                        + hidden2 * latent + latent * out_dim_pad)
    bias_bytes = 4 * (hidden1 + hidden2 + latent + out_dim_pad)
    x_tile_bytes = 2 * tile_eff * in_dim
    out_tile_bytes = 4 * tile_eff * out_dim_pad
    interm_bytes = 4 * tile_eff * (hidden1 + hidden2 + latent + out_dim_pad)
    vmem_bytes = (2 * (weight_bytes + bias_bytes + x_tile_bytes + out_tile_bytes)
                  + 2 * interm_bytes + (4 << 20))
    vmem_bytes = int(min(max(vmem_bytes, 32 << 20), 64 << 20))

    # Advisory cost hint for the XLA scheduler.
    flops = 2 * b_pad * (in_dim * hidden1 + hidden1 * hidden2
                         + hidden2 * latent + latent * out_dim_pad)
    bytes_accessed = int(2 * b_pad * in_dim + weight_bytes + bias_bytes
                         + 4 * b_pad * out_dim_pad)

    heads = pl.pallas_call(
        encoder_kernel,
        out_shape=jax.ShapeDtypeStruct((b_pad, out_dim_pad), jnp.float32),
        grid=grid,
        in_specs=[
            # x: tiled over batch, double-buffered by Pallas behind compute.
            pl.BlockSpec((tile_eff, in_dim), lambda i: (i, 0)),
            # Weights & biases: constant index_map -> VMEM-resident across steps.
            # TODO(synk): if hidden dims grow (>=2048), single-buffer these
            # (pipeline_mode=pl.Buffered(1)) and add a K-tiled grid axis with a
            # VMEM accumulator to stay inside v7x's 64 MiB VMEM.
            pl.BlockSpec((in_dim, hidden1), lambda i: (0, 0)),
            pl.BlockSpec((1, hidden1), lambda i: (0, 0)),
            pl.BlockSpec((hidden1, hidden2), lambda i: (0, 0)),
            pl.BlockSpec((1, hidden2), lambda i: (0, 0)),
            pl.BlockSpec((hidden2, latent), lambda i: (0, 0)),
            pl.BlockSpec((1, latent), lambda i: (0, 0)),
            pl.BlockSpec((latent, out_dim_pad), lambda i: (0, 0)),
            pl.BlockSpec((1, out_dim_pad), lambda i: (0, 0)),
        ],
        out_specs=pl.BlockSpec((tile_eff, out_dim_pad), lambda i: (i, 0)),
        compiler_params=pltpu.CompilerParams(
            # Batch tiles are independent -> megacore sharding on v7x,
            # harmless on single-TC v5e/v6e.
            dimension_semantics=("parallel",),
            vmem_limit_bytes=vmem_bytes,
        ),
        cost_estimate=pl.CostEstimate(
            flops=flops, transcendentals=0, bytes_accessed=bytes_accessed),
    )(xb, w1, b1, w2, b2, w3, b3, wh, bh)

    heads = heads[:B]
    mu = heads[:, :latent]
    logvar = heads[:, latent:out_dim]
    return mu, logvar


def init_params(key, input_dim, latent_dim, hidden_dims):
    """Deterministic synthetic parameter init (PyTorch-Linear-like uniform scale)."""
    dims = [input_dim] + list(hidden_dims) + [latent_dim]
    params = {}
    names = ["w1", "w2", "w3"]
    keys = jax.random.split(key, 5)
    for i, name in enumerate(names):
        fan_in, fan_out = dims[i], dims[i + 1]
        bound = 1.0 / (fan_in ** 0.5)
        kw, kb = jax.random.split(keys[i])
        params[name] = jax.random.uniform(kw, (fan_in, fan_out), jnp.float32,
                                          minval=-bound, maxval=bound)
        params["b" + name[1:]] = jax.random.uniform(kb, (1, fan_out), jnp.float32,
                                                    minval=-bound, maxval=bound)
    for name, k in (("mu", keys[3]), ("lv", keys[4])):
        bound = 1.0 / (latent_dim ** 0.5)
        kw, kb = jax.random.split(k)
        params["w" + name] = jax.random.uniform(kw, (latent_dim, latent_dim), jnp.float32,
                                                minval=-bound, maxval=bound)
        params["b" + name] = jax.random.uniform(kb, (1, latent_dim), jnp.float32,
                                                minval=-bound, maxval=bound)
    return params


def reference_forward(x, p):
    """Pure-JAX f32 reference (matches the PyTorch module exactly)."""
    h1 = jnp.maximum(x @ p["w1"] + p["b1"], 0.0)
    h2 = jnp.maximum(h1 @ p["w2"] + p["b2"], 0.0)
    z = h2 @ p["w3"] + p["b3"]
    mu = z @ p["wmu"] + p["bmu"]
    logvar = z @ p["wlv"] + p["blv"]
    return mu, logvar


if __name__ == "__main__":
    # Small shapes consistent with the module's forward.  latent=64 means the
    # fused [mu|logvar] slab is exactly 128 lanes (no extra lane padding).
    batch = 64
    input_dim = 32
    hidden_dims = [64, 64]     # module default is [256, 256]; scaled down
    latent_dim = 64

    key = jax.random.PRNGKey(0)
    kx, kp = jax.random.split(key)
    x = jax.random.normal(kx, (batch, input_dim), jnp.float32)
    params = init_params(kp, input_dim, latent_dim, hidden_dims)

    # Demo batch (64) fits one tile -> grid=(1,), no per-step overhead on
    # single-TC v5e/v6e; large batches automatically get >= 2 parallel tiles.
    mu, logvar = encoder_forward(x, params)
    jax.block_until_ready((mu, logvar))

    mu_ref, logvar_ref = reference_forward(x, params)
    assert mu.shape == (batch, latent_dim) and logvar.shape == (batch, latent_dim)
    # bf16 matmul operands (f32 accumulation) drift slightly from the pure-f32
    # reference; tolerance sized accordingly.
    assert jnp.allclose(mu, mu_ref, atol=5e-2, rtol=5e-2)
    assert jnp.allclose(logvar, logvar_ref, atol=5e-2, rtol=5e-2)

    print("KERNEL_OK")
</pallas_src>

<mosaic_0001>
module attributes {stable_mosaic.version = 11 : i64} {
  func.func @encoder_kernel(%arg0: i32, %arg1: memref<64x32xbf16, #tpu.memory_space<vmem>>, %arg2: memref<32x64xbf16, #tpu.memory_space<vmem>>, %arg3: memref<1x64xf32, #tpu.memory_space<vmem>>, %arg4: memref<64x64xbf16, #tpu.memory_space<vmem>>, %arg5: memref<1x64xf32, #tpu.memory_space<vmem>>, %arg6: memref<64x64xbf16, #tpu.memory_space<vmem>>, %arg7: memref<1x64xf32, #tpu.memory_space<vmem>>, %arg8: memref<64x128xbf16, #tpu.memory_space<vmem>>, %arg9: memref<1x128xf32, #tpu.memory_space<vmem>>, %arg10: memref<64x128xf32, #tpu.memory_space<vmem>>) attributes {dimension_semantics = [#tpu.dimension_semantics<parallel>], iteration_bounds = array<i64: 1>, scalar_prefetch = 0 : i64, scratch_operands = 0 : i64, tpu.core_type = #tpu.core_type<tc>, window_params = [{transform_indices = @transform_0, window_bounds = array<i64: 64, 32>}, {pipeline_mode = #tpu.pipeline_mode<synchronous>, transform_indices = @transform_1, window_bounds = array<i64: 32, 64>}, {pipeline_mode = #tpu.pipeline_mode<synchronous>, transform_indices = @transform_2, window_bounds = array<i64: 1, 64>}, {pipeline_mode = #tpu.pipeline_mode<synchronous>, transform_indices = @transform_3, window_bounds = array<i64: 64, 64>}, {pipeline_mode = #tpu.pipeline_mode<synchronous>, transform_indices = @transform_4, window_bounds = array<i64: 1, 64>}, {pipeline_mode = #tpu.pipeline_mode<synchronous>, transform_indices = @transform_5, window_bounds = array<i64: 64, 64>}, {pipeline_mode = #tpu.pipeline_mode<synchronous>, transform_indices = @transform_6, window_bounds = array<i64: 1, 64>}, {pipeline_mode = #tpu.pipeline_mode<synchronous>, transform_indices = @transform_7, window_bounds = array<i64: 64, 128>}, {pipeline_mode = #tpu.pipeline_mode<synchronous>, transform_indices = @transform_8, window_bounds = array<i64: 1, 128>}, {transform_indices = @transform_9, window_bounds = array<i64: 64, 128>}]} {
    %c0 = arith.constant 0 : index
    %c0_0 = arith.constant 0 : index
    %0 = vector.load %arg1[%c0, %c0_0] : memref<64x32xbf16, #tpu.memory_space<vmem>>, vector<64x32xbf16>
    %c0_1 = arith.constant 0 : index
    %c0_2 = arith.constant 0 : index
    %1 = vector.load %arg2[%c0_1, %c0_2] : memref<32x64xbf16, #tpu.memory_space<vmem>>, vector<32x64xbf16>
    %cst = arith.constant dense<0.000000e+00> : vector<64x64xf32>
    %2 = tpu.matmul %0, %1, %cst {dimension_numbers = #tpu.dot_dimension_numbers<[1], [0], [0], [1], [0, 0, 1, 1], [], []>} : vector<64x32xbf16>, vector<32x64xbf16>, vector<64x64xf32> -> vector<64x64xf32>
    %c0_3 = arith.constant 0 : index
    %c0_4 = arith.constant 0 : index
    %3 = vector.load %arg3[%c0_3, %c0_4] : memref<1x64xf32, #tpu.memory_space<vmem>>, vector<1x64xf32>
    %4 = vector.broadcast %3 : vector<1x64xf32> to vector<64x64xf32>
    %5 = arith.addf %2, %4 : vector<64x64xf32>
    %cst_5 = arith.constant 0.000000e+00 : f32
    %6 = vector.broadcast %cst_5 : f32 to vector<64x64xf32>
    %7 = arith.maximumf %5, %6 : vector<64x64xf32>
    %8 = arith.truncf %7 : vector<64x64xf32> to vector<64x64xbf16>
    %c0_6 = arith.constant 0 : index
    %c0_7 = arith.constant 0 : index
    %9 = vector.load %arg4[%c0_6, %c0_7] : memref<64x64xbf16, #tpu.memory_space<vmem>>, vector<64x64xbf16>
    %cst_8 = arith.constant dense<0.000000e+00> : vector<64x64xf32>
    %10 = tpu.matmul %8, %9, %cst_8 {dimension_numbers = #tpu.dot_dimension_numbers<[1], [0], [0], [1], [0, 0, 1, 1], [], []>} : vector<64x64xbf16>, vector<64x64xbf16>, vector<64x64xf32> -> vector<64x64xf32>
    %c0_9 = arith.constant 0 : index
    %c0_10 = arith.constant 0 : index
    %11 = vector.load %arg5[%c0_9, %c0_10] : memref<1x64xf32, #tpu.memory_space<vmem>>, vector<1x64xf32>
    %12 = vector.broadcast %11 : vector<1x64xf32> to vector<64x64xf32>
    %13 = arith.addf %10, %12 : vector<64x64xf32>
    %cst_11 = arith.constant 0.000000e+00 : f32
    %14 = vector.broadcast %cst_11 : f32 to vector<64x64xf32>
    %15 = arith.maximumf %13, %14 : vector<64x64xf32>
    %16 = arith.truncf %15 : vector<64x64xf32> to vector<64x64xbf16>
    %c0_12 = arith.constant 0 : index
    %c0_13 = arith.constant 0 : index
    %17 = vector.load %arg6[%c0_12, %c0_13] : memref<64x64xbf16, #tpu.memory_space<vmem>>, vector<64x64xbf16>
    %cst_14 = arith.constant dense<0.000000e+00> : vector<64x64xf32>
    %18 = tpu.matmul %16, %17, %cst_14 {dimension_numbers = #tpu.dot_dimension_numbers<[1], [0], [0], [1], [0, 0, 1, 1], [], []>} : vector<64x64xbf16>, vector<64x64xbf16>, vector<64x64xf32> -> vector<64x64xf32>
    %c0_15 = arith.constant 0 : index
    %c0_16 = arith.constant 0 : index
    %19 = vector.load %arg7[%c0_15, %c0_16] : memref<1x64xf32, #tpu.memory_space<vmem>>, vector<1x64xf32>
    %20 = vector.broadcast %19 : vector<1x64xf32> to vector<64x64xf32>
    %21 = arith.addf %18, %20 : vector<64x64xf32>
    %22 = arith.truncf %21 : vector<64x64xf32> to vector<64x64xbf16>
    %c0_17 = arith.constant 0 : index
    %c0_18 = arith.constant 0 : index
    %23 = vector.load %arg8[%c0_17, %c0_18] : memref<64x128xbf16, #tpu.memory_space<vmem>>, vector<64x128xbf16>
    %cst_19 = arith.constant dense<0.000000e+00> : vector<64x128xf32>
    %24 = tpu.matmul %22, %23, %cst_19 {dimension_numbers = #tpu.dot_dimension_numbers<[1], [0], [0], [1], [0, 0, 1, 1], [], []>} : vector<64x64xbf16>, vector<64x128xbf16>, vector<64x128xf32> -> vector<64x128xf32>
    %c0_20 = arith.constant 0 : index
    %c0_21 = arith.constant 0 : index
    %25 = vector.load %arg9[%c0_20, %c0_21] : memref<1x128xf32, #tpu.memory_space<vmem>>, vector<1x128xf32>
    %26 = vector.broadcast %25 : vector<1x128xf32> to vector<64x128xf32>
    %27 = arith.addf %24, %26 : vector<64x128xf32>
    %c0_22 = arith.constant 0 : index
    %c0_23 = arith.constant 0 : index
    %28 = vector.load %arg10[%c0_22, %c0_23] : memref<64x128xf32, #tpu.memory_space<vmem>>, vector<64x128xf32>
    tpu.vector_store %arg10[%c0_22, %c0_23], %27 {strides = array<i32>} : memref<64x128xf32, #tpu.memory_space<vmem>>, vector<64x128xf32>,
    return
  }
  func.func @transform_0(%arg0: i32) -> (i32, i32) {
    %c0_i32 = arith.constant 0 : i32
    %c0_i32_0 = arith.constant 0 : i32
    return %arg0, %c0_i32 : i32, i32
  }
  func.func @transform_1(%arg0: i32) -> (i32, i32) {
    %c0_i32 = arith.constant 0 : i32
    %c0_i32_0 = arith.constant 0 : i32
    %c0_i32_1 = arith.constant 0 : i32
    return %c0_i32, %c0_i32_0 : i32, i32
  }
  func.func @transform_2(%arg0: i32) -> (i32, i32) {
    %c0_i32 = arith.constant 0 : i32
    %c0_i32_0 = arith.constant 0 : i32
    %c0_i32_1 = arith.constant 0 : i32
    return %c0_i32, %c0_i32_0 : i32, i32
  }
  func.func @transform_3(%arg0: i32) -> (i32, i32) {
    %c0_i32 = arith.constant 0 : i32
    %c0_i32_0 = arith.constant 0 : i32
    %c0_i32_1 = arith.constant 0 : i32
    return %c0_i32, %c0_i32_0 : i32, i32
  }
  func.func @transform_4(%arg0: i32) -> (i32, i32) {
    %c0_i32 = arith.constant 0 : i32
    %c0_i32_0 = arith.constant 0 : i32
    %c0_i32_1 = arith.constant 0 : i32
    return %c0_i32, %c0_i32_0 : i32, i32
  }
  func.func @transform_5(%arg0: i32) -> (i32, i32) {
    %c0_i32 = arith.constant 0 : i32
    %c0_i32_0 = arith.constant 0 : i32
    %c0_i32_1 = arith.constant 0 : i32
    return %c0_i32, %c0_i32_0 : i32, i32
  }
  func.func @transform_6(%arg0: i32) -> (i32, i32) {
    %c0_i32 = arith.constant 0 : i32
    %c0_i32_0 = arith.constant 0 : i32
    %c0_i32_1 = arith.constant 0 : i32
    return %c0_i32, %c0_i32_0 : i32, i32
  }
  func.func @transform_7(%arg0: i32) -> (i32, i32) {
    %c0_i32 = arith.constant 0 : i32
    %c0_i32_0 = arith.constant 0 : i32
    %c0_i32_1 = arith.constant 0 : i32
    return %c0_i32, %c0_i32_0 : i32, i32
  }
  func.func @transform_8(%arg0: i32) -> (i32, i32) {
    %c0_i32 = arith.constant 0 : i32
    %c0_i32_0 = arith.constant 0 : i32
    %c0_i32_1 = arith.constant 0 : i32
    return %c0_i32, %c0_i32_0 : i32, i32
  }
  func.func @transform_9(%arg0: i32) -> (i32, i32) {
    %c0_i32 = arith.constant 0 : i32
    %c0_i32_0 = arith.constant 0 : i32
    return %arg0, %c0_i32 : i32, i32
  }
}

</mosaic_0001>

<llo_original>
// kernel: tpu_custom_call.1
$region0: #{tpu_custom_call.1}
  #allocation0 [shape = 'u32[]', space=smem, size = 0x4, offset = 0x4, fixed_abs, tag = 'smem constant byte address 0x4 - core index']
  #allocation1 [shape = 'u32[144,128]{1,0:T(1,128)}', space=vmem, size = 0x12000, scoped, tag = 'internal scratch']
  %s0 = inlined_call_operand.vmem [shape: bf16[64,32], index: 0, kind: input, shape index: {}]
  %s1 = inlined_call_operand.hbm [shape: bf16[32,64], index: 1, kind: input, shape index: {}]
  %s2 = inlined_call_operand.vmem [shape: f32[1,64], index: 2, kind: input, shape index: {}]
  %s3 = inlined_call_operand.vmem [shape: bf16[64,64], index: 3, kind: input, shape index: {}]
  %s4 = inlined_call_operand.vmem [shape: f32[1,64], index: 4, kind: input, shape index: {}]
  %s5 = inlined_call_operand.vmem [shape: bf16[64,64], index: 5, kind: input, shape index: {}]
  %s6 = inlined_call_operand.vmem [shape: f32[1,64], index: 6, kind: input, shape index: {}]
  %s7 = inlined_call_operand.hbm [shape: bf16[64,128], index: 7, kind: input, shape index: {}]
  %s8 = inlined_call_operand.vmem [shape: f32[1,128], index: 8, kind: input, shape index: {}]
  %s9 = inlined_call_operand.hbm [shape: f32[64,128], index: 9, kind: output, shape index: {}]
  %s10 = sld [smem:[#allocation0]]
  $region54: #{tpu_custom_call.1} parent=0
    _
  %s12 = ssub.s32 1, %s10
  %s13 = scalar_select 0, %s12, %s10
  $region1: #{tpu_custom_call.1} parent=0
    #allocation2 [shape = 'u8[8192]{0}', space=vmem, size = 0x2000, scoped, tag = 'input window, operand 1, single buffered']
    #allocation3 [shape = 's32[1]{0}', space=sflag, size = 0x4, scoped, tag = 'scoped memory for tpu_custom_call.1']
    #allocation4 [shape = 's32[1]{0}', space=sflag, size = 0x4, scoped, tag = 'scoped memory for tpu_custom_call.1']
    #allocation5 [shape = 'u8[16384]{0}', space=vmem, size = 0x4000, scoped, tag = 'input window, operand 7, single buffered']
    #allocation6 [shape = 's32[1]{0}', space=sflag, size = 0x4, scoped, tag = 'scoped memory for tpu_custom_call.1']
    #allocation7 [shape = 'u8[32768]{0}', space=vmem, size = 0x8000, scoped, tag = 'output window, operand 0, single buffered']
    %14 = vsyncpa [#allocation3], 0
    %15 = vsyncpa [#allocation6], 0
    %16 = vsyncpa [#allocation4], 0
    // Predicated region
    $region2: #{tpu_custom_call.1} parent=1 // pred_check
      _
    $region3: #{tpu_custom_call.1} parent=1 // pred_check_branch
      %18 = sbr.rel (0) target = $region5
    $region4: #{tpu_custom_call.1} parent=1 // pred_region
      _
    $region5: #{tpu_custom_call.1} parent=1 // pred_fallthru
      _
    // Predicated region
    $region6: #{tpu_custom_call.1} parent=1 // pred_check
      _
    $region7: #{tpu_custom_call.1} parent=1 // pred_check_branch
      %20 = sbr.rel (0) target = $region9
    $region8: #{tpu_custom_call.1} parent=1 // pred_region
      %s22 = ssub.s32 256, 256
      %23 = vsyncadd [#allocation3], %s22
      %s24 = sshll.u32 [#allocation2], 4
      %s25 = int_to_ptr.vmem [resolvable:$true] %s24
      %30 = dma.hbm_to_vmem [thread:$0]  %s1, 256, %s25, [#allocation3], 64, 64, 4
    $region9: #{tpu_custom_call.1} parent=1 // pred_fallthru
      _
    // Predicated region
    $region10: #{tpu_custom_call.1} parent=1 // pred_check
      _
    $region11: #{tpu_custom_call.1} parent=1 // pred_check_branch
      %32 = sbr.rel (0) target = $region13
    $region12: #{tpu_custom_call.1} parent=1 // pred_region
      _
    $region13: #{tpu_custom_call.1} parent=1 // pred_fallthru
      _
    // Predicated region
    $region14: #{tpu_custom_call.1} parent=1 // pred_check
      _
    $region15: #{tpu_custom_call.1} parent=1 // pred_check_branch
      %34 = sbr.rel (0) target = $region17
    $region16: #{tpu_custom_call.1} parent=1 // pred_region
      _
    $region17: #{tpu_custom_call.1} parent=1 // pred_fallthru
      _
    // Predicated region
    $region18: #{tpu_custom_call.1} parent=1 // pred_check
      _
    $region19: #{tpu_custom_call.1} parent=1 // pred_check_branch
      %36 = sbr.rel (0) target = $region21
    $region20: #{tpu_custom_call.1} parent=1 // pred_region
      _
    $region21: #{tpu_custom_call.1} parent=1 // pred_fallthru
      _
    // Predicated region
    $region22: #{tpu_custom_call.1} parent=1 // pred_check
      _
    $region23: #{tpu_custom_call.1} parent=1 // pred_check_branch
      %38 = sbr.rel (0) target = $region25
    $region24: #{tpu_custom_call.1} parent=1 // pred_region
      _
    $region25: #{tpu_custom_call.1} parent=1 // pred_fallthru
      _
    // Predicated region
    $region26: #{tpu_custom_call.1} parent=1 // pred_check
      _
    $region27: #{tpu_custom_call.1} parent=1 // pred_check_branch
      %40 = sbr.rel (0) target = $region29
    $region28: #{tpu_custom_call.1} parent=1 // pred_region
      _
    $region29: #{tpu_custom_call.1} parent=1 // pred_fallthru
      _
    // Predicated region
    $region30: #{tpu_custom_call.1} parent=1 // pred_check
      _
    $region31: #{tpu_custom_call.1} parent=1 // pred_check_branch
      %42 = sbr.rel (0) target = $region33
    $region32: #{tpu_custom_call.1} parent=1 // pred_region
      %s44 = ssub.s32 512, 512
      %45 = vsyncadd [#allocation6], %s44
      %s46 = sshll.u32 [#allocation5], 4
      %s47 = int_to_ptr.vmem [resolvable:$true] %s46
      %52 = dma.hbm_to_vmem [thread:$0]  %s7, 512, %s47, [#allocation6], 64, 64, 4
    $region33: #{tpu_custom_call.1} parent=1 // pred_fallthru
      _
    // Predicated region
    $region34: #{tpu_custom_call.1} parent=1 // pred_check
      _
    $region35: #{tpu_custom_call.1} parent=1 // pred_check_branch
      %54 = sbr.rel (0) target = $region37
    $region36: #{tpu_custom_call.1} parent=1 // pred_region
      _
    $region37: #{tpu_custom_call.1} parent=1 // pred_fallthru
      _
    // Predicated region
    $region38: #{tpu_custom_call.1} parent=1 // pred_check
      _
    $region39: #{tpu_custom_call.1} parent=1 // pred_check_branch
      %56 = sbr.rel (0) target = $region41
    $region40: #{tpu_custom_call.1} parent=1 // pred_region
      %57 = dma.done [#allocation3], 256
    $region41: #{tpu_custom_call.1} parent=1 // pred_fallthru
      _
    // Predicated region
    $region42: #{tpu_custom_call.1} parent=1 // pred_check
      _
    $region43: #{tpu_custom_call.1} parent=1 // pred_check_branch
      %59 = sbr.rel (0) target = $region45
    $region44: #{tpu_custom_call.1} parent=1 // pred_region
      %60 = dma.done [#allocation6], 512
    $region45: #{tpu_custom_call.1} parent=1 // pred_fallthru
      _
    %v62 = vld [vmem:[%s0] sm:$0xf]
    %v63 = vld [vmem:[%s0 + $0x4] sm:$0xf]
    %v64 = vld [vmem:[%s0 + $0x8] sm:$0xf]
    %v65 = vld [vmem:[%s0 + $0xc] sm:$0xf]
    %v66 = vld [vmem:[%s0 + $0x10] sm:$0xf]
    %v67 = vld [vmem:[%s0 + $0x14] sm:$0xf]
    %v68 = vld [vmem:[%s0 + $0x18] sm:$0xf]
    %v69 = vld [vmem:[%s0 + $0x1c] sm:$0xf]
    %v70 = vld [vmem:[#allocation2] sm:$0xf]
    %v71 = vld [vmem:[#allocation2 + $0x4] sm:$0xf]
    %v72 = vld [vmem:[#allocation2 + $0x8] sm:$0xf]
    %v73 = vld [vmem:[#allocation2 + $0xc] sm:$0xf]
    %v74 = vld [vmem:[%s2] sm:$0x1]
    %v76 = vlaneseq
    %v77 = vshrl.u32 %v76, 7
    %v78 = vsub.s32 0, %v77
    %v79 = vrot.slane %v74, %v78
    %v89 = vunpack.c.l.b16 %v62
    %v90 = vunpack.c.l.b16 %v63
    %v91 = vunpack.c.l.b16 %v64
    %v92 = vunpack.c.l.b16 %v65
    %v93 = vunpack.c.l.b16 %v66
    %v94 = vunpack.c.l.b16 %v67
    %v95 = vunpack.c.l.b16 %v68
    %v96 = vunpack.c.l.b16 %v69
    %v97 = vpack.c.b16 %v90, %v89
    %v98 = vpack.c.b16 %v92, %v91
    %v99 = vpack.c.b16 %v94, %v93
    %v100 = vpack.c.b16 %v96, %v95
    %v105 = vunpack.c.l.b16 %v70
    %v106 = vunpack.c.l.b16 %v71
    %v107 = vunpack.c.l.b16 %v72
    %v108 = vunpack.c.l.b16 %v73
    %v109 = vpack.c.b16 %v106, %v105
    %v110 = vpack.c.b16 %v108, %v107
    %vm113 = vcmask 261120
    %v115 = vsel %vm113, %v97, 0
    %v118 = vsel %vm113, %v98, 0
    %v121 = vsel %vm113, %v99, 0
    %v124 = vsel %vm113, %v100, 0
    %126 = vmatprep.subr.bf16.mxu0 0
    %127 = vmatpush1.bf16.msra.mxu0 %v109
    %128 = vmatprep.subr.bf16.mxu0 0
    %129 = vmatpush1.bf16.msra.mxu0 %v110
    %130 = vmatprep.subr.bf16.mxu0 0
    %131 = vmatpush1.bf16.msra.mxu0 0
    %132 = vmatprep.subr.bf16.mxu0 0
    %133 = vmatpush1.bf16.msra.mxu0 0
    %134 = vmatprep.subr.bf16.mxu0 0
    %135 = vmatpush1.bf16.msra.mxu0 0
    %136 = vmatprep.subr.bf16.mxu0 0
    %137 = vmatpush1.bf16.msra.mxu0 0
    %138 = vmatprep.subr.bf16.mxu0 0
    %139 = vmatpush1.bf16.msra.mxu0 0
    %140 = vmatprep.subr.bf16.mxu0 0
    %141 = vmatpush1.bf16.msra.mxu0 0
    %142 = vmatprep.subr.bf16.mxu0 0
    %143 = vmatpush1.bf16.msra.mxu0 0
    %144 = vmatprep.subr.bf16.mxu0 0
    %145 = vmatpush1.bf16.msra.mxu0 0
    %146 = vmatprep.subr.bf16.mxu0 0
    %147 = vmatpush1.bf16.msra.mxu0 0
    %148 = vmatprep.subr.bf16.mxu0 0
    %149 = vmatpush1.bf16.msra.mxu0 0
    %150 = vmatprep.subr.bf16.mxu0 0
    %151 = vmatpush1.bf16.msra.mxu0 0
    %152 = vmatprep.subr.bf16.mxu0 0
    %153 = vmatpush1.bf16.msra.mxu0 0
    %154 = vmatprep.subr.bf16.mxu0 0
    %155 = vmatpush1.bf16.msra.mxu0 0
    %156 = vmatprep.subr.bf16.mxu0 0
    %157 = vmatpush1.bf16.msra.mxu0 0
    %158 = vmatprep.mubr.bf16.mxu0 0
    %159 = vmatmul.mubr.bf16.gmra.mrb[0].mxu0 %v115
    %v160 = vpop.f32.mrb[0].mxu0
    %v161 = vadd.f32 %v79, %v160
    %v162 = vpop.f32.mrb[0].mxu0
    %v163 = vpop.f32.mrb[0].mxu0
    %v164 = vadd.f32 %v79, %v163
    %v165 = vpop.f32.mrb[0].mxu0
    %166 = vmatprep.mubr.bf16.mxu0 0
    %167 = vmatmul.mubr.bf16.gmra.mrb[0].mxu0 %v118
    %v168 = vpop.f32.mrb[0].mxu0
    %v169 = vadd.f32 %v79, %v168
    %v170 = vpop.f32.mrb[0].mxu0
    %v171 = vpop.f32.mrb[0].mxu0
    %v172 = vadd.f32 %v79, %v171
    %v173 = vpop.f32.mrb[0].mxu0
    %174 = vmatprep.mubr.bf16.mxu0 0
    %175 = vmatmul.mubr.bf16.gmra.mrb[0].mxu0 %v121
    %v176 = vpop.f32.mrb[0].mxu0
    %v177 = vadd.f32 %v79, %v176
    %v178 = vpop.f32.mrb[0].mxu0
    %v179 = vpop.f32.mrb[0].mxu0
    %v180 = vadd.f32 %v79, %v179
    %v181 = vpop.f32.mrb[0].mxu0
    %182 = vmatprep.mubr.bf16.mxu0 0
    %183 = vmatmul.mubr.bf16.gmra.mrb[0].mxu0 %v124
    %v184 = vpop.f32.mrb[0].mxu0
    %v185 = vadd.f32 %v79, %v184
    %v186 = vpop.f32.mrb[0].mxu0
    %v187 = vpop.f32.mrb[0].mxu0
    %v188 = vadd.f32 %v79, %v187
    %v189 = vpop.f32.mrb[0].mxu0
    %190 = vdwg.mxu0
    %v191 = vmax.f32 %v161, 0.0
    %v192 = vmax.f32 %v164, 0.0
    %v193 = vmax.f32 %v169, 0.0
    %v194 = vmax.f32 %v172, 0.0
    %v195 = vmax.f32 %v177, 0.0
    %v196 = vmax.f32 %v180, 0.0
    %v197 = vmax.f32 %v185, 0.0
    %v198 = vmax.f32 %v188, 0.0
    %v199 = vpack.c.bf16 %v192, %v191
    %v200 = vpack.c.bf16 %v194, %v193
    %v201 = vpack.c.bf16 %v196, %v195
    %v202 = vpack.c.bf16 %v198, %v197
    %v203 = vld [vmem:[%s3] sm:$0xf]
    %v204 = vld [vmem:[%s3 + $0x4] sm:$0xf]
    %v205 = vld [vmem:[%s3 + $0x8] sm:$0xf]
    %v206 = vld [vmem:[%s3 + $0xc] sm:$0xf]
    %v207 = vld [vmem:[%s3 + $0x10] sm:$0xf]
    %v208 = vld [vmem:[%s3 + $0x14] sm:$0xf]
    %v209 = vld [vmem:[%s3 + $0x18] sm:$0xf]
    %v210 = vld [vmem:[%s3 + $0x1c] sm:$0xf]
    %v211 = vld [vmem:[%s4] sm:$0x1]
    %v213 = vlaneseq
    %v214 = vshrl.u32 %v213, 7
    %v215 = vsub.s32 0, %v214
    %v216 = vrot.slane %v211, %v215
    %v226 = vunpack.c.l.b16 %v203
    %v227 = vunpack.c.l.b16 %v204
    %v228 = vunpack.c.l.b16 %v205
    %v229 = vunpack.c.l.b16 %v206
    %v230 = vunpack.c.l.b16 %v207
    %v231 = vunpack.c.l.b16 %v208
    %v232 = vunpack.c.l.b16 %v209
    %v233 = vunpack.c.l.b16 %v210
    %v234 = vpack.c.b16 %v227, %v226
    %v235 = vpack.c.b16 %v229, %v228
    %v236 = vpack.c.b16 %v231, %v230
    %v237 = vpack.c.b16 %v233, %v232
    %vm242 = vcmask 523264
    %v244 = vsel %vm242, %v199, 0
    %v247 = vsel %vm242, %v200, 0
    %v250 = vsel %vm242, %v201, 0
    %v253 = vsel %vm242, %v202, 0
    %255 = vmatprep.subr.bf16.mxu0 0
    %256 = vmatpush1.bf16.msra.mxu0 %v234
    %257 = vmatprep.subr.bf16.mxu0 0
    %258 = vmatpush1.bf16.msra.mxu0 %v235
    %259 = vmatprep.subr.bf16.mxu0 0
    %260 = vmatpush1.bf16.msra.mxu0 %v236
    %261 = vmatprep.subr.bf16.mxu0 0
    %262 = vmatpush1.bf16.msra.mxu0 %v237
    %263 = vmatprep.subr.bf16.mxu0 0
    %264 = vmatpush1.bf16.msra.mxu0 0
    %265 = vmatprep.subr.bf16.mxu0 0
    %266 = vmatpush1.bf16.msra.mxu0 0
    %267 = vmatprep.subr.bf16.mxu0 0
    %268 = vmatpush1.bf16.msra.mxu0 0
    %269 = vmatprep.subr.bf16.mxu0 0
    %270 = vmatpush1.bf16.msra.mxu0 0
    %271 = vmatprep.subr.bf16.mxu0 0
    %272 = vmatpush1.bf16.msra.mxu0 0
    %273 = vmatprep.subr.bf16.mxu0 0
    %274 = vmatpush1.bf16.msra.mxu0 0
    %275 = vmatprep.subr.bf16.mxu0 0
    %276 = vmatpush1.bf16.msra.mxu0 0
    %277 = vmatprep.subr.bf16.mxu0 0
    %278 = vmatpush1.bf16.msra.mxu0 0
    %279 = vmatprep.subr.bf16.mxu0 0
    %280 = vmatpush1.bf16.msra.mxu0 0
    %281 = vmatprep.subr.bf16.mxu0 0
    %282 = vmatpush1.bf16.msra.mxu0 0
    %283 = vmatprep.subr.bf16.mxu0 0
    %284 = vmatpush1.bf16.msra.mxu0 0
    %285 = vmatprep.subr.bf16.mxu0 0
    %286 = vmatpush1.bf16.msra.mxu0 0
    %287 = vmatprep.mubr.bf16.mxu0 0
    %288 = vmatmul.mubr.bf16.gmra.mrb[0].mxu0 %v244
    %v289 = vpop.f32.mrb[0].mxu0
    %v290 = vadd.f32 %v216, %v289
    %v291 = vpop.f32.mrb[0].mxu0
    %v292 = vpop.f32.mrb[0].mxu0
    %v293 = vadd.f32 %v216, %v292
    %v294 = vpop.f32.mrb[0].mxu0
    %295 = vmatprep.mubr.bf16.mxu0 0
    %296 = vmatmul.mubr.bf16.gmra.mrb[0].mxu0 %v247
    %v297 = vpop.f32.mrb[0].mxu0
    %v298 = vadd.f32 %v216, %v297
    %v299 = vpop.f32.mrb[0].mxu0
    %v300 = vpop.f32.mrb[0].mxu0
    %v301 = vadd.f32 %v216, %v300
    %v302 = vpop.f32.mrb[0].mxu0
    %303 = vmatprep.mubr.bf16.mxu0 0
    %304 = vmatmul.mubr.bf16.gmra.mrb[0].mxu0 %v250
    %v305 = vpop.f32.mrb[0].mxu0
    %v306 = vadd.f32 %v216, %v305
    %v307 = vpop.f32.mrb[0].mxu0
    %v308 = vpop.f32.mrb[0].mxu0
    %v309 = vadd.f32 %v216, %v308
    %v310 = vpop.f32.mrb[0].mxu0
    %311 = vmatprep.mubr.bf16.mxu0 0
    %312 = vmatmul.mubr.bf16.gmra.mrb[0].mxu0 %v253
    %v313 = vpop.f32.mrb[0].mxu0
    %v314 = vadd.f32 %v216, %v313
    %v315 = vpop.f32.mrb[0].mxu0
    %v316 = vpop.f32.mrb[0].mxu0
    %v317 = vadd.f32 %v216, %v316
    %v318 = vpop.f32.mrb[0].mxu0
    %319 = vdwg.mxu0
    %v320 = vmax.f32 %v290, 0.0
    %v321 = vmax.f32 %v293, 0.0
    %v322 = vmax.f32 %v298, 0.0
    %v323 = vmax.f32 %v301, 0.0
    %v324 = vmax.f32 %v306, 0.0
    %v325 = vmax.f32 %v309, 0.0
    %v326 = vmax.f32 %v314, 0.0
    %v327 = vmax.f32 %v317, 0.0
    %v328 = vpack.c.bf16 %v321, %v320
    %v329 = vpack.c.bf16 %v323, %v322
    %v330 = vpack.c.bf16 %v325, %v324
    %v331 = vpack.c.bf16 %v327, %v326
    %v332 = vld [vmem:[%s5] sm:$0xf]
    %v333 = vld [vmem:[%s5 + $0x4] sm:$0xf]
    %v334 = vld [vmem:[%s5 + $0x8] sm:$0xf]
    %v335 = vld [vmem:[%s5 + $0xc] sm:$0xf]
    %v336 = vld [vmem:[%s5 + $0x10] sm:$0xf]
    %v337 = vld [vmem:[%s5 + $0x14] sm:$0xf]
    %v338 = vld [vmem:[%s5 + $0x18] sm:$0xf]
    %v339 = vld [vmem:[%s5 + $0x1c] sm:$0xf]
    %v340 = vld [vmem:[%s6] sm:$0x1]
    %v342 = vlaneseq
    %v343 = vshrl.u32 %v342, 7
    %v344 = vsub.s32 0, %v343
    %v345 = vrot.slane %v340, %v344
    %v355 = vunpack.c.l.b16 %v332
    %v356 = vunpack.c.l.b16 %v333
    %v357 = vunpack.c.l.b16 %v334
    %v358 = vunpack.c.l.b16 %v335
    %v359 = vunpack.c.l.b16 %v336
    %v360 = vunpack.c.l.b16 %v337
    %v361 = vunpack.c.l.b16 %v338
    %v362 = vunpack.c.l.b16 %v339
    %v363 = vpack.c.b16 %v356, %v355
    %v364 = vpack.c.b16 %v358, %v357
    %v365 = vpack.c.b16 %v360, %v359
    %v366 = vpack.c.b16 %v362, %v361
    %v372 = vsel %vm242, %v328, 0
    %v375 = vsel %vm242, %v329, 0
    %v378 = vsel %vm242, %v330, 0
    %v381 = vsel %vm242, %v331, 0
    %383 = vmatprep.subr.bf16.mxu0 0
    %384 = vmatpush1.bf16.msra.mxu0 %v363
    %385 = vmatprep.subr.bf16.mxu0 0
    %386 = vmatpush1.bf16.msra.mxu0 %v364
    %387 = vmatprep.subr.bf16.mxu0 0
    %388 = vmatpush1.bf16.msra.mxu0 %v365
    %389 = vmatprep.subr.bf16.mxu0 0
    %390 = vmatpush1.bf16.msra.mxu0 %v366
    %391 = vmatprep.subr.bf16.mxu0 0
    %392 = vmatpush1.bf16.msra.mxu0 0
    %393 = vmatprep.subr.bf16.mxu0 0
    %394 = vmatpush1.bf16.msra.mxu0 0
    %395 = vmatprep.subr.bf16.mxu0 0
    %396 = vmatpush1.bf16.msra.mxu0 0
    %397 = vmatprep.subr.bf16.mxu0 0
    %398 = vmatpush1.bf16.msra.mxu0 0
    %399 = vmatprep.subr.bf16.mxu0 0
    %400 = vmatpush1.bf16.msra.mxu0 0
    %401 = vmatprep.subr.bf16.mxu0 0
    %402 = vmatpush1.bf16.msra.mxu0 0
    %403 = vmatprep.subr.bf16.mxu0 0
    %404 = vmatpush1.bf16.msra.mxu0 0
    %405 = vmatprep.subr.bf16.mxu0 0
    %406 = vmatpush1.bf16.msra.mxu0 0
    %407 = vmatprep.subr.bf16.mxu0 0
    %408 = vmatpush1.bf16.msra.mxu0 0
    %409 = vmatprep.subr.bf16.mxu0 0
    %410 = vmatpush1.bf16.msra.mxu0 0
    %411 = vmatprep.subr.bf16.mxu0 0
    %412 = vmatpush1.bf16.msra.mxu0 0
    %413 = vmatprep.subr.bf16.mxu0 0
    %414 = vmatpush1.bf16.msra.mxu0 0
    %415 = vmatprep.mubr.bf16.mxu0 0
    %416 = vmatmul.mubr.bf16.gmra.mrb[0].mxu0 %v372
    %v417 = vpop.f32.mrb[0].mxu0
    %v418 = vadd.f32 %v345, %v417
    %v419 = vpop.f32.mrb[0].mxu0
    %v420 = vpop.f32.mrb[0].mxu0
    %v421 = vadd.f32 %v345, %v420
    %v422 = vpop.f32.mrb[0].mxu0
    %423 = vmatprep.mubr.bf16.mxu0 0
    %424 = vmatmul.mubr.bf16.gmra.mrb[0].mxu0 %v375
    %v425 = vpop.f32.mrb[0].mxu0
    %v426 = vadd.f32 %v345, %v425
    %v427 = vpop.f32.mrb[0].mxu0
    %v428 = vpop.f32.mrb[0].mxu0
    %v429 = vadd.f32 %v345, %v428
    %v430 = vpop.f32.mrb[0].mxu0
    %431 = vmatprep.mubr.bf16.mxu0 0
    %432 = vmatmul.mubr.bf16.gmra.mrb[0].mxu0 %v378
    %v433 = vpop.f32.mrb[0].mxu0
    %v434 = vadd.f32 %v345, %v433
    %v435 = vpop.f32.mrb[0].mxu0
    %v436 = vpop.f32.mrb[0].mxu0
    %v437 = vadd.f32 %v345, %v436
    %v438 = vpop.f32.mrb[0].mxu0
    %439 = vmatprep.mubr.bf16.mxu0 0
    %440 = vmatmul.mubr.bf16.gmra.mrb[0].mxu0 %v381
    %v441 = vpop.f32.mrb[0].mxu0
    %v442 = vadd.f32 %v345, %v441
    %v443 = vpop.f32.mrb[0].mxu0
    %v444 = vpop.f32.mrb[0].mxu0
    %v445 = vadd.f32 %v345, %v444
    %v446 = vpop.f32.mrb[0].mxu0
    %447 = vdwg.mxu0
    %v448 = vpack.c.bf16 %v421, %v418
    %v449 = vpack.c.bf16 %v429, %v426
    %v450 = vpack.c.bf16 %v437, %v434
    %v451 = vpack.c.bf16 %v445, %v442
    %v452 = vld [vmem:[#allocation5] sm:$0xf]
    %v453 = vld [vmem:[#allocation5 + $0x4] sm:$0xf]
    %v454 = vld [vmem:[#allocation5 + $0x8] sm:$0xf]
    %v455 = vld [vmem:[#allocation5 + $0xc] sm:$0xf]
    %v456 = vld [vmem:[#allocation5 + $0x10] sm:$0xf]
    %v457 = vld [vmem:[#allocation5 + $0x14] sm:$0xf]
    %v458 = vld [vmem:[#allocation5 + $0x18] sm:$0xf]
    %v459 = vld [vmem:[#allocation5 + $0x1c] sm:$0xf]
    %v460 = vld [vmem:[%s8] sm:$0x1]
    %v462 = vlaneseq
    %v463 = vshrl.u32 %v462, 7
    %v464 = vsub.s32 0, %v463
    %v465 = vrot.slane %v460, %v464
    %v475 = vunpack.c.l.b16 %v452
    %v476 = vunpack.c.l.b16 %v453
    %v477 = vunpack.c.l.b16 %v454
    %v478 = vunpack.c.l.b16 %v455
    %v479 = vunpack.c.l.b16 %v456
    %v480 = vunpack.c.l.b16 %v457
    %v481 = vunpack.c.l.b16 %v458
    %v482 = vunpack.c.l.b16 %v459
    %v483 = vpack.c.b16 %v476, %v475
    %v484 = vpack.c.b16 %v478, %v477
    %v485 = vpack.c.b16 %v480, %v479
    %v486 = vpack.c.b16 %v482, %v481
    %v492 = vsel %vm242, %v448, 0
    %v495 = vsel %vm242, %v449, 0
    %v498 = vsel %vm242, %v450, 0
    %v501 = vsel %vm242, %v451, 0
    %503 = vmatprep.subr.bf16.mxu0 0
    %504 = vmatpush1.bf16.msra.mxu0 %v483
    %505 = vmatprep.subr.bf16.mxu0 0
    %506 = vmatpush1.bf16.msra.mxu0 %v484
    %507 = vmatprep.subr.bf16.mxu0 0
    %508 = vmatpush1.bf16.msra.mxu0 %v485
    %509 = vmatprep.subr.bf16.mxu0 0
    %510 = vmatpush1.bf16.msra.mxu0 %v486
    %511 = vmatprep.subr.bf16.mxu0 0
    %512 = vmatpush1.bf16.msra.mxu0 0
    %513 = vmatprep.subr.bf16.mxu0 0
    %514 = vmatpush1.bf16.msra.mxu0 0
    %515 = vmatprep.subr.bf16.mxu0 0
    %516 = vmatpush1.bf16.msra.mxu0 0
    %517 = vmatprep.subr.bf16.mxu0 0
    %518 = vmatpush1.bf16.msra.mxu0 0
    %519 = vmatprep.subr.bf16.mxu0 0
    %520 = vmatpush1.bf16.msra.mxu0 0
    %521 = vmatprep.subr.bf16.mxu0 0
    %522 = vmatpush1.bf16.msra.mxu0 0
    %523 = vmatprep.subr.bf16.mxu0 0
    %524 = vmatpush1.bf16.msra.mxu0 0
    %525 = vmatprep.subr.bf16.mxu0 0
    %526 = vmatpush1.bf16.msra.mxu0 0
    %527 = vmatprep.subr.bf16.mxu0 0
    %528 = vmatpush1.bf16.msra.mxu0 0
    %529 = vmatprep.subr.bf16.mxu0 0
    %530 = vmatpush1.bf16.msra.mxu0 0
    %531 = vmatprep.subr.bf16.mxu0 0
    %532 = vmatpush1.bf16.msra.mxu0 0
    %533 = vmatprep.subr.bf16.mxu0 0
    %534 = vmatpush1.bf16.msra.mxu0 0
    %535 = vmatprep.mubr.bf16.mxu0 0
    %536 = vmatmul.mubr.bf16.gmra.mrb[0].mxu0 %v492
    %v537 = vpop.f32.mrb[0].mxu0
    %v538 = vadd.f32 %v465, %v537
    %v539 = vpop.f32.mrb[0].mxu0
    %v540 = vpop.f32.mrb[0].mxu0
    %v541 = vadd.f32 %v465, %v540
    %v542 = vpop.f32.mrb[0].mxu0
    %543 = vmatprep.mubr.bf16.mxu0 0
    %544 = vmatmul.mubr.bf16.gmra.mrb[0].mxu0 %v495
    %v545 = vpop.f32.mrb[0].mxu0
    %v546 = vadd.f32 %v465, %v545
    %v547 = vpop.f32.mrb[0].mxu0
    %v548 = vpop.f32.mrb[0].mxu0
    %v549 = vadd.f32 %v465, %v548
    %v550 = vpop.f32.mrb[0].mxu0
    %551 = vmatprep.mubr.bf16.mxu0 0
    %552 = vmatmul.mubr.bf16.gmra.mrb[0].mxu0 %v498
    %v553 = vpop.f32.mrb[0].mxu0
    %v554 = vadd.f32 %v465, %v553
    %v555 = vpop.f32.mrb[0].mxu0
    %v556 = vpop.f32.mrb[0].mxu0
    %v557 = vadd.f32 %v465, %v556
    %v558 = vpop.f32.mrb[0].mxu0
    %559 = vmatprep.mubr.bf16.mxu0 0
    %560 = vmatmul.mubr.bf16.gmra.mrb[0].mxu0 %v501
    %v561 = vpop.f32.mrb[0].mxu0
    %v562 = vadd.f32 %v465, %v561
    %v563 = vpop.f32.mrb[0].mxu0
    %v564 = vpop.f32.mrb[0].mxu0
    %v565 = vadd.f32 %v465, %v564
    %v566 = vpop.f32.mrb[0].mxu0
    %567 = vdwg.mxu0
    %568 = vst [vmem:[#allocation7] sm:$0xff] %v538
    %569 = vst [vmem:[#allocation7 + $0x8] sm:$0xff] %v541
    %570 = vst [vmem:[#allocation7 + $0x10] sm:$0xff] %v546
    %571 = vst [vmem:[#allocation7 + $0x18] sm:$0xff] %v549
    %572 = vst [vmem:[#allocation7 + $0x20] sm:$0xff] %v554
    %573 = vst [vmem:[#allocation7 + $0x28] sm:$0xff] %v557
    %574 = vst [vmem:[#allocation7 + $0x30] sm:$0xff] %v562
    %575 = vst [vmem:[#allocation7 + $0x38] sm:$0xff] %v565
    // Predicated region
    $region46: #{tpu_custom_call.1} parent=1 // pred_check
      _
    $region47: #{tpu_custom_call.1} parent=1 // pred_check_branch
      %577 = sbr.rel (0) target = $region49
    $region48: #{tpu_custom_call.1} parent=1 // pred_region
      %s579 = ssub.s32 1024, 1024
      %580 = vsyncadd [#allocation4], %s579
      %s581 = sshll.u32 [#allocation7], 4
      %s582 = int_to_ptr.vmem [resolvable:$true] %s581
      %587 = dma.vmem_to_hbm [thread:$0]  %s582, 1024, %s9, [#allocation4], 128, 128, 8
    $region49: #{tpu_custom_call.1} parent=1 // pred_fallthru
      _
    // Predicated region
    $region50: #{tpu_custom_call.1} parent=1 // pred_check
      _
    $region51: #{tpu_custom_call.1} parent=1 // pred_check_branch
      %589 = sbr.rel (0) target = $region53
    $region52: #{tpu_custom_call.1} parent=1 // pred_region
      %590 = dma.done [#allocation4], 1024
    $region53: #{tpu_custom_call.1} parent=1 // pred_fallthru
      _
    %591 = vsyncpa [#allocation3], 1
    %592 = vsyncpa [#allocation6], 1
    %593 = vsyncpa [#allocation4], 1

</llo_original>
